<compile_context>
chip_gen: v7x
topology: tpu7x:2x2x1
jax: 0.10.0
libtpu: 0.0.40
codegen_flags: <defaults>
</compile_context>

<pallas_src>
import jax
import jax.numpy as jnp
from jax.experimental import pallas as pl
from jax.experimental.pallas import tpu as pltpu


def _round_up(x, m):
    return ((x + m - 1) // m) * m


def _fit_block(dim, target, align):
    """Largest block <= target that is either a multiple of `align` or the
    full (small) dimension, per the TPU (8,128) block-shape rule."""
    if dim <= align:
        return dim
    t = min(target, dim)
    return max(align, (t // align) * align)


def _td_linear_kernel(x_ref, w_ref, b_ref, o_ref, acc_ref):
    # x_ref: (tm, tk), w_ref: (tk, tn), b_ref: (1, tn),
    # o_ref: (tm, tn), acc_ref: (tm, tn) f32 scratch.
    k = pl.program_id(2)

    @pl.when(k == 0)
    def _():
        # Initialize the accumulator with the broadcast bias: added exactly
        # once per output tile, no extra pass at the end.
        acc_ref[...] = jnp.broadcast_to(
            b_ref[...].astype(jnp.float32), acc_ref.shape
        )

    acc_ref[...] += jnp.dot(
        x_ref[...], w_ref[...], preferred_element_type=jnp.float32
    )

    @pl.when(k == pl.num_programs(2) - 1)
    def _():
        o_ref[...] = acc_ref[...].astype(o_ref.dtype)


def time_distributed_linear(
    x,
    weight,
    bias,
    *,
    tm_target=512,
    tn_target=256,
    tk_target=512,
    full_k_threshold=1024,
):
    """y[b, t] = x[b, t] @ weight + bias for every (batch, time) step.

    x:      (B, T, F_in)
    weight: (F_in, F_out)   (transposed PyTorch nn.Linear weight)
    bias:   (F_out,)
    returns (B, T, F_out)
    """
    B, T, F_in = x.shape
    F_out = weight.shape[1]
    M = B * T

    x_item = jnp.dtype(x.dtype).itemsize
    w_item = jnp.dtype(weight.dtype).itemsize
    b_item = jnp.dtype(bias.dtype).itemsize

    # --- Tile selection --------------------------------------------------
    sub = 8 * max(1, 4 // x_item)            # sublane multiple: 8 f32, 16 bf16
    tm = _fit_block(M, tm_target, sub)       # row tile
    tn = _fit_block(F_out, tn_target, 128)   # lane-dense output columns

    # Contraction tile: keep the full K resident when it is small; otherwise
    # prefer a 128-multiple that divides F_in (no K padding needed); else pad.
    if F_in <= full_k_threshold:
        tk = F_in
    else:
        tk = next((c for c in range(tk_target, 0, -128) if F_in % c == 0), 0)
        if tk == 0:
            tk = tk_target
    K_pad = _round_up(F_in, tk)

    # --- Fold (batch, time); zero-pad only the contraction axis if needed --
    x_flat = x.reshape(M, F_in)              # free (contiguous view)
    w = weight
    if K_pad != F_in:
        # Zero padding along K is correctness-critical (ragged-K garbage would
        # corrupt the accumulation).  Only happens for large, awkward F_in.
        x_flat = jnp.pad(x_flat, ((0, 0), (0, K_pad - F_in)))
        w = jnp.pad(w, ((0, K_pad - F_in), (0, 0)))
    b2 = bias.reshape(1, F_out)

    nm = pl.cdiv(M, tm)
    nn = pl.cdiv(F_out, tn)
    nk = K_pad // tk

    # --- Explicit VMEM limit (default scoped limit is the binding one) ----
    try:
        vmem_cap = pltpu.get_tpu_info().vmem_capacity_bytes
    except Exception:
        vmem_cap = 64 * 1024 * 1024
    vmem_limit = int(min(vmem_cap * 3 // 4, 96 * 1024 * 1024))

    # Defensive shrink: double-buffered blocks + f32 accumulator must stay
    # well under the scoped limit (rarely triggers with the default targets).
    def _vmem_bytes(tm_, tn_, tk_):
        return (
            2 * (tm_ * tk_ * x_item + tk_ * tn_ * w_item + tn_ * b_item)
            + 2 * tm_ * tn_ * x_item      # double-buffered output block
            + tm_ * tn_ * 4               # f32 accumulator scratch
        )

    while _vmem_bytes(tm, tn, tk) > vmem_limit // 2 and tm > sub:
        tm = max(sub, tm // 2)
        nm = pl.cdiv(M, tm)

    cost = pl.CostEstimate(
        flops=2 * M * K_pad * F_out,
        transcendentals=0,
        bytes_accessed=(
            nn * M * K_pad * x_item        # x re-streamed once per column tile
            + nm * K_pad * F_out * w_item  # weights re-streamed per row tile
            + F_out * b_item
            + M * F_out * x_item
        ),
    )

    y_flat = pl.pallas_call(
        _td_linear_kernel,
        out_shape=jax.ShapeDtypeStruct((M, F_out), x.dtype),
        # Column tiles outermost, row tiles middle, K innermost (reduction).
        grid=(nn, nm, nk),
        in_specs=[
            pl.BlockSpec((tm, tk), lambda j, i, k: (i, k)),   # x row/K tile
            pl.BlockSpec((tk, tn), lambda j, i, k: (k, j)),   # weight tile
            pl.BlockSpec((1, tn), lambda j, i, k: (0, j)),    # bias tile
        ],
        out_specs=pl.BlockSpec((tm, tn), lambda j, i, k: (i, j)),
        scratch_shapes=[pltpu.VMEM((tm, tn), jnp.float32)],
        compiler_params=pltpu.CompilerParams(
            # Both output axes parallel (megacore / v7x 2-TC sharding),
            # reduction axis last and arbitrary.
            dimension_semantics=("parallel", "parallel", "arbitrary"),
            vmem_limit_bytes=vmem_limit,
        ),
        cost_estimate=cost,
    )(x_flat, w, b2)

    # Unfold back to (B, T, F_out) — free reshape.
    return y_flat.reshape(B, T, F_out)


if __name__ == "__main__":
    key = jax.random.PRNGKey(0)
    k_x, k_w, k_b = jax.random.split(key, 3)

    # --- Test 1: small, clean shapes (matches the module's intended use) --
    B, T, F_in, F_out = 2, 8, 32, 32
    x = jax.random.normal(k_x, (B, T, F_in), dtype=jnp.float32)
    weight = jax.random.normal(k_w, (F_in, F_out), dtype=jnp.float32) * 0.1
    bias = jax.random.normal(k_b, (F_out,), dtype=jnp.float32) * 0.1

    y = time_distributed_linear(x, weight, bias)
    jax.block_until_ready(y)

    y_ref = (x.reshape(B * T, F_in) @ weight + bias).reshape(B, T, F_out)
    assert y.shape == (B, T, F_out)
    assert jnp.allclose(y, y_ref, atol=1e-5, rtol=1e-5)

    # --- Test 2: ragged rows/cols + K-tiling path (accumulator + masking) --
    B2, T2, F_in2, F_out2 = 2, 9, 256, 160
    x2 = jax.random.normal(k_x, (B2, T2, F_in2), dtype=jnp.float32)
    w2 = jax.random.normal(k_w, (F_in2, F_out2), dtype=jnp.float32) * 0.05
    b2 = jax.random.normal(k_b, (F_out2,), dtype=jnp.float32) * 0.05

    y2 = time_distributed_linear(
        x2, w2, b2,
        tm_target=16, tn_target=128, tk_target=128, full_k_threshold=128,
    )
    jax.block_until_ready(y2)

    y2_ref = (x2.reshape(B2 * T2, F_in2) @ w2 + b2).reshape(B2, T2, F_out2)
    assert y2.shape == (B2, T2, F_out2)
    assert jnp.allclose(y2, y2_ref, atol=1e-4, rtol=1e-4)

    print("KERNEL_OK")
</pallas_src>

<mosaic_0001>
module attributes {stable_mosaic.version = 11 : i64} {
  func.func @_td_linear_kernel(%arg0: i32, %arg1: i32, %arg2: i32, %arg3: memref<16x32xf32, #tpu.memory_space<vmem>>, %arg4: memref<32x32xf32, #tpu.memory_space<vmem>>, %arg5: memref<1x32xf32, #tpu.memory_space<vmem>>, %arg6: memref<16x32xf32, #tpu.memory_space<vmem>>, %arg7: memref<16x32xf32, #tpu.memory_space<vmem>>) attributes {dimension_semantics = [#tpu.dimension_semantics<parallel>, #tpu.dimension_semantics<parallel>, #tpu.dimension_semantics<arbitrary>], iteration_bounds = array<i64: 1, 1, 1>, scalar_prefetch = 0 : i64, scratch_operands = 1 : i64, tpu.core_type = #tpu.core_type<tc>, window_params = [{transform_indices = @transform_0, window_bounds = array<i64: 16, 32>}, {transform_indices = @transform_1, window_bounds = array<i64: 32, 32>}, {transform_indices = @transform_2, window_bounds = array<i64: 1, 32>}, {transform_indices = @transform_3, window_bounds = array<i64: 16, 32>}]} {
    %c0_i32 = arith.constant 0 : i32
    %0 = arith.cmpi eq, %arg2, %c0_i32 : i32
    %1 = arith.extui %0 : i1 to i32
    %c0_i32_0 = arith.constant 0 : i32
    %2 = arith.cmpi ne, %1, %c0_i32_0 : i32
    scf.if %2 {
      %c0_10 = arith.constant 0 : index
      %c0_11 = arith.constant 0 : index
      %12 = vector.load %arg5[%c0_10, %c0_11] : memref<1x32xf32, #tpu.memory_space<vmem>>, vector<1x32xf32>
      %13 = vector.shape_cast %12 : vector<1x32xf32> to vector<1x32xf32>
      %14 = vector.broadcast %13 : vector<1x32xf32> to vector<16x32xf32>
      %c0_12 = arith.constant 0 : index
      %c0_13 = arith.constant 0 : index
      %15 = vector.load %arg7[%c0_12, %c0_13] : memref<16x32xf32, #tpu.memory_space<vmem>>, vector<16x32xf32>
      tpu.vector_store %arg7[%c0_12, %c0_13], %14 {strides = array<i32>} : memref<16x32xf32, #tpu.memory_space<vmem>>, vector<16x32xf32>,
    } else {
    }
    %c0 = arith.constant 0 : index
    %c0_1 = arith.constant 0 : index
    %3 = vector.load %arg7[%c0, %c0_1] : memref<16x32xf32, #tpu.memory_space<vmem>>, vector<16x32xf32>
    %c0_2 = arith.constant 0 : index
    %c0_3 = arith.constant 0 : index
    %4 = vector.load %arg3[%c0_2, %c0_3] : memref<16x32xf32, #tpu.memory_space<vmem>>, vector<16x32xf32>
    %c0_4 = arith.constant 0 : index
    %c0_5 = arith.constant 0 : index
    %5 = vector.load %arg4[%c0_4, %c0_5] : memref<32x32xf32, #tpu.memory_space<vmem>>, vector<32x32xf32>
    %cst = arith.constant dense<0.000000e+00> : vector<16x32xf32>
    %6 = tpu.matmul %4, %5, %cst {dimension_numbers = #tpu.dot_dimension_numbers<[1], [0], [0], [1], [0, 0, 1, 1], [], []>} : vector<16x32xf32>, vector<32x32xf32>, vector<16x32xf32> -> vector<16x32xf32>
    %7 = arith.addf %3, %6 : vector<16x32xf32>
    %c0_6 = arith.constant 0 : index
    %c0_7 = arith.constant 0 : index
    %8 = vector.load %arg7[%c0_6, %c0_7] : memref<16x32xf32, #tpu.memory_space<vmem>>, vector<16x32xf32>
    tpu.vector_store %arg7[%c0_6, %c0_7], %7 {strides = array<i32>} : memref<16x32xf32, #tpu.memory_space<vmem>>, vector<16x32xf32>,
    %c0_i32_8 = arith.constant 0 : i32
    %9 = arith.cmpi eq, %arg2, %c0_i32_8 : i32
    %10 = arith.extui %9 : i1 to i32
    %c0_i32_9 = arith.constant 0 : i32
    %11 = arith.cmpi ne, %10, %c0_i32_9 : i32
    scf.if %11 {
      %c0_10 = arith.constant 0 : index
      %c0_11 = arith.constant 0 : index
      %12 = vector.load %arg7[%c0_10, %c0_11] : memref<16x32xf32, #tpu.memory_space<vmem>>, vector<16x32xf32>
      %c0_12 = arith.constant 0 : index
      %c0_13 = arith.constant 0 : index
      %13 = vector.load %arg6[%c0_12, %c0_13] : memref<16x32xf32, #tpu.memory_space<vmem>>, vector<16x32xf32>
      tpu.vector_store %arg6[%c0_12, %c0_13], %12 {strides = array<i32>} : memref<16x32xf32, #tpu.memory_space<vmem>>, vector<16x32xf32>,
    } else {
    }
    return
  }
  func.func @transform_0(%arg0: i32, %arg1: i32, %arg2: i32) -> (i32, i32) {
    %c0_i32 = arith.constant 0 : i32
    return %arg1, %arg2 : i32, i32
  }
  func.func @transform_1(%arg0: i32, %arg1: i32, %arg2: i32) -> (i32, i32) {
    %c0_i32 = arith.constant 0 : i32
    return %arg2, %arg0 : i32, i32
  }
  func.func @transform_2(%arg0: i32, %arg1: i32, %arg2: i32) -> (i32, i32) {
    %c0_i32 = arith.constant 0 : i32
    %c0_i32_0 = arith.constant 0 : i32
    return %c0_i32, %arg0 : i32, i32
  }
  func.func @transform_3(%arg0: i32, %arg1: i32, %arg2: i32) -> (i32, i32) {
    %c0_i32 = arith.constant 0 : i32
    return %arg1, %arg0 : i32, i32
  }
}

</mosaic_0001>

<llo_original>
// kernel: tpu_custom_call.1
$region0: #{tpu_custom_call.1}
  #allocation0 [shape = 'u32[]', space=smem, size = 0x4, offset = 0x4, fixed_abs, tag = 'smem constant byte address 0x4 - core index']
  #allocation1 [shape = 'u32[144,128]{1,0:T(1,128)}', space=vmem, size = 0x12000, scoped, tag = 'internal scratch']
  #allocation2 [shape = 'f32[16,32]{1,0:T(8,128)}', space=vmem, size = 0x2000, scoped, tag = 'scratch operand']
  %s0 = inlined_call_operand.hbm [shape: f32[16,32], index: 0, kind: input, shape index: {}]
  %s1 = inlined_call_operand.hbm [shape: f32[32,32], index: 1, kind: input, shape index: {}]
  %s2 = inlined_call_operand.vmem [shape: f32[1,32], index: 2, kind: input, shape index: {}]
  %s3 = inlined_call_operand.hbm [shape: f32[16,32], index: 3, kind: output, shape index: {}]
  %s4 = sld [smem:[#allocation0]]
  $region38: #{tpu_custom_call.1} parent=0
    _
  %s6 = ssub.s32 1, %s4
  %s7 = scalar_select 0, %s6, %s4
  $region1: #{tpu_custom_call.1} parent=0
    #allocation3 [shape = 'u8[8192]{0}', space=vmem, size = 0x2000, scoped, tag = 'input window, operand 0, single buffered']
    #allocation4 [shape = 's32[1]{0}', space=sflag, size = 0x4, scoped, tag = 'scoped memory for tpu_custom_call.1']
    #allocation5 [shape = 's32[1]{0}', space=sflag, size = 0x4, scoped, tag = 'scoped memory for tpu_custom_call.1']
    #allocation6 [shape = 'u8[16384]{0}', space=vmem, size = 0x4000, scoped, tag = 'input window, operand 1, single buffered']
    #allocation7 [shape = 's32[1]{0}', space=sflag, size = 0x4, scoped, tag = 'scoped memory for tpu_custom_call.1']
    #allocation8 [shape = 'u8[8192]{0}', space=vmem, size = 0x2000, scoped, tag = 'output window, operand 0, single buffered']
    %8 = vsyncpa [#allocation4], 0
    %9 = vsyncpa [#allocation7], 0
    %10 = vsyncpa [#allocation5], 0
    // Predicated region
    $region2: #{tpu_custom_call.1} parent=1 // pred_check
      _
    $region3: #{tpu_custom_call.1} parent=1 // pred_check_branch
      %12 = sbr.rel (0) target = $region5
    $region4: #{tpu_custom_call.1} parent=1 // pred_region
      %s14 = ssub.s32 256, 256
      %15 = vsyncadd [#allocation4], %s14
      %s16 = sshll.u32 [#allocation3], 4
      %s17 = int_to_ptr.vmem [resolvable:$true] %s16
      %22 = dma.hbm_to_vmem [thread:$0]  %s0, 256, %s17, [#allocation4], 128, 128, 8
    $region5: #{tpu_custom_call.1} parent=1 // pred_fallthru
      _
    // Predicated region
    $region6: #{tpu_custom_call.1} parent=1 // pred_check
      _
    $region7: #{tpu_custom_call.1} parent=1 // pred_check_branch
      %24 = sbr.rel (0) target = $region9
    $region8: #{tpu_custom_call.1} parent=1 // pred_region
      %s26 = ssub.s32 512, 512
      %27 = vsyncadd [#allocation7], %s26
      %s28 = sshll.u32 [#allocation6], 4
      %s29 = int_to_ptr.vmem [resolvable:$true] %s28
      %34 = dma.hbm_to_vmem [thread:$0]  %s1, 512, %s29, [#allocation7], 128, 128, 8
    $region9: #{tpu_custom_call.1} parent=1 // pred_fallthru
      _
    // Predicated region
    $region10: #{tpu_custom_call.1} parent=1 // pred_check
      _
    $region11: #{tpu_custom_call.1} parent=1 // pred_check_branch
      %36 = sbr.rel (0) target = $region13
    $region12: #{tpu_custom_call.1} parent=1 // pred_region
      _
    $region13: #{tpu_custom_call.1} parent=1 // pred_fallthru
      _
    // Predicated region
    $region14: #{tpu_custom_call.1} parent=1 // pred_check
      _
    $region15: #{tpu_custom_call.1} parent=1 // pred_check_branch
      %38 = sbr.rel (0) target = $region17
    $region16: #{tpu_custom_call.1} parent=1 // pred_region
      %39 = dma.done [#allocation4], 256
    $region17: #{tpu_custom_call.1} parent=1 // pred_fallthru
      _
    // Predicated region
    $region18: #{tpu_custom_call.1} parent=1 // pred_check
      _
    $region19: #{tpu_custom_call.1} parent=1 // pred_check_branch
      %41 = sbr.rel (0) target = $region21
    $region20: #{tpu_custom_call.1} parent=1 // pred_region
      %42 = dma.done [#allocation7], 512
    $region21: #{tpu_custom_call.1} parent=1 // pred_fallthru
      _
    %p43 = scmp.eq.s32.totalorder 0, 0
    // Predicated region
    $region22: #{tpu_custom_call.1} parent=1 // pred_check
      %p44 = pneg %p43
    $region23: #{tpu_custom_call.1} parent=1 // pred_check_branch
      %46 = sbr.rel (%p44) target = $region25
    $region24: #{tpu_custom_call.1} parent=1 // pred_region
      %v47 = vld [vmem:[%s2] sm:$0x1]
      %v49 = vlaneseq
      %v50 = vshrl.u32 %v49, 7
      %v51 = vsub.s32 0, %v50
      %v52 = vrot.slane %v47, %v51
      %vm54 = vcmask 261120
      %55 = vst.msk [vmem:[#allocation2] sm:$0xff] %vm54, %v52
      %56 = vst.msk [vmem:[#allocation2 + $0x8] sm:$0xff] %vm54, %v52
    $region25: #{tpu_custom_call.1} parent=1 // pred_fallthru
      _
    %v57 = vld [vmem:[#allocation2] sm:$0xff]
    %v58 = vld [vmem:[#allocation2 + $0x8] sm:$0xff]
    %v59 = vld [vmem:[#allocation3] sm:$0xff]
    %v60 = vld [vmem:[#allocation3 + $0x8] sm:$0xff]
    %v61 = vld [vmem:[#allocation6] sm:$0xff]
    %v62 = vld [vmem:[#allocation6 + $0x8] sm:$0xff]
    %v63 = vld [vmem:[#allocation6 + $0x10] sm:$0xff]
    %v64 = vld [vmem:[#allocation6 + $0x18] sm:$0xff]
    %vm65 = vcmask 261120
    %v67 = vsel %vm65, %v59, 0
    %v70 = vsel %vm65, %v60, 0
    %72 = vmatprep.subr.mxu0 0.0
    %73 = vmatpush1.msra.mxu0 %v61
    %74 = vmatprep.subr.mxu0 0.0
    %75 = vmatpush1.msra.mxu0 %v62
    %76 = vmatprep.subr.mxu0 0.0
    %77 = vmatpush1.msra.mxu0 %v63
    %78 = vmatprep.subr.mxu0 0.0
    %79 = vmatpush1.msra.mxu0 %v64
    %80 = vmatprep.subr.mxu0 0.0
    %81 = vmatpush1.msra.mxu0 0.0
    %82 = vmatprep.subr.mxu0 0.0
    %83 = vmatpush1.msra.mxu0 0.0
    %84 = vmatprep.subr.mxu0 0.0
    %85 = vmatpush1.msra.mxu0 0.0
    %86 = vmatprep.subr.mxu0 0.0
    %87 = vmatpush1.msra.mxu0 0.0
    %88 = vmatprep.subr.mxu0 0.0
    %89 = vmatpush1.msra.mxu0 0.0
    %90 = vmatprep.subr.mxu0 0.0
    %91 = vmatpush1.msra.mxu0 0.0
    %92 = vmatprep.subr.mxu0 0.0
    %93 = vmatpush1.msra.mxu0 0.0
    %94 = vmatprep.subr.mxu0 0.0
    %95 = vmatpush1.msra.mxu0 0.0
    %96 = vmatprep.subr.mxu0 0.0
    %97 = vmatpush1.msra.mxu0 0.0
    %98 = vmatprep.subr.mxu0 0.0
    %99 = vmatpush1.msra.mxu0 0.0
    %100 = vmatprep.subr.mxu0 0.0
    %101 = vmatpush1.msra.mxu0 0.0
    %102 = vmatprep.subr.mxu0 0.0
    %103 = vmatpush1.msra.mxu0 0.0
    %104 = vmatprep.subr.mxu0 0.0
    %105 = vmatpush1.msra.mxu0 0.0
    %106 = vmatprep.subr.mxu0 0.0
    %107 = vmatpush1.msra.mxu0 0.0
    %108 = vmatprep.subr.mxu0 0.0
    %109 = vmatpush1.msra.mxu0 0.0
    %110 = vmatprep.subr.mxu0 0.0
    %111 = vmatpush1.msra.mxu0 0.0
    %112 = vmatprep.subr.mxu0 0.0
    %113 = vmatpush1.msra.mxu0 0.0
    %114 = vmatprep.subr.mxu0 0.0
    %115 = vmatpush1.msra.mxu0 0.0
    %116 = vmatprep.subr.mxu0 0.0
    %117 = vmatpush1.msra.mxu0 0.0
    %118 = vmatprep.subr.mxu0 0.0
    %119 = vmatpush1.msra.mxu0 0.0
    %120 = vmatprep.subr.mxu0 0.0
    %121 = vmatpush1.msra.mxu0 0.0
    %122 = vmatprep.subr.mxu0 0.0
    %123 = vmatpush1.msra.mxu0 0.0
    %124 = vmatprep.subr.mxu0 0.0
    %125 = vmatpush1.msra.mxu0 0.0
    %126 = vmatprep.subr.mxu0 0.0
    %127 = vmatpush1.msra.mxu0 0.0
    %128 = vmatprep.subr.mxu0 0.0
    %129 = vmatpush1.msra.mxu0 0.0
    %130 = vmatprep.subr.mxu0 0.0
    %131 = vmatpush1.msra.mxu0 0.0
    %132 = vmatprep.subr.mxu0 0.0
    %133 = vmatpush1.msra.mxu0 0.0
    %134 = vmatprep.subr.mxu0 0.0
    %135 = vmatpush1.msra.mxu0 0.0
    %136 = vmatprep.mubr.f32.mxu0 0.0
    %137 = vmatmul.mubr.f32.gmra.mrb[0].mxu0 %v67
    %v138 = vpop.f32.mrb[0].mxu0
    %v139 = vadd.f32 0.0, %v138
    %v140 = vpop.f32.mrb[0].mxu0
    %141 = vmatprep.mubr.f32.mxu0 0.0
    %142 = vmatmul.mubr.f32.gmra.mrb[0].mxu0 %v70
    %v143 = vpop.f32.mrb[0].mxu0
    %v144 = vadd.f32 0.0, %v143
    %v145 = vpop.f32.mrb[0].mxu0
    %146 = vdwg.mxu0
    %v147 = vadd.f32 %v57, %v139
    %v148 = vadd.f32 %v58, %v144
    %149 = vst.msk [vmem:[#allocation2] sm:$0xff] %vm65, %v147
    %150 = vst.msk [vmem:[#allocation2 + $0x8] sm:$0xff] %vm65, %v148
    // Predicated region
    $region26: #{tpu_custom_call.1} parent=1 // pred_check
      %p151 = pneg %p43
    $region27: #{tpu_custom_call.1} parent=1 // pred_check_branch
      %153 = sbr.rel (%p151) target = $region29
    $region28: #{tpu_custom_call.1} parent=1 // pred_region
      %v154 = vld [vmem:[#allocation2] sm:$0xff]
      %v155 = vld [vmem:[#allocation2 + $0x8] sm:$0xff]
      %156 = vst.msk [vmem:[#allocation8] sm:$0xff] %vm65, %v154
      %157 = vst.msk [vmem:[#allocation8 + $0x8] sm:$0xff] %vm65, %v155
    $region29: #{tpu_custom_call.1} parent=1 // pred_fallthru
      _
    // Predicated region
    $region30: #{tpu_custom_call.1} parent=1 // pred_check
      _
    $region31: #{tpu_custom_call.1} parent=1 // pred_check_branch
      %159 = sbr.rel (0) target = $region33
    $region32: #{tpu_custom_call.1} parent=1 // pred_region
      %s161 = ssub.s32 256, 256
      %162 = vsyncadd [#allocation5], %s161
      %s163 = sshll.u32 [#allocation8], 4
      %s164 = int_to_ptr.vmem [resolvable:$true] %s163
      %169 = dma.vmem_to_hbm [thread:$0]  %s164, 256, %s3, [#allocation5], 128, 128, 8
    $region33: #{tpu_custom_call.1} parent=1 // pred_fallthru
      _
    // Predicated region
    $region34: #{tpu_custom_call.1} parent=1 // pred_check
      _
    $region35: #{tpu_custom_call.1} parent=1 // pred_check_branch
      %171 = sbr.rel (0) target = $region37
    $region36: #{tpu_custom_call.1} parent=1 // pred_region
      %172 = dma.done [#allocation5], 256
    $region37: #{tpu_custom_call.1} parent=1 // pred_fallthru
      _
    %173 = vsyncpa [#allocation4], 1
    %174 = vsyncpa [#allocation7], 1
    %175 = vsyncpa [#allocation5], 1

</llo_original>
